<compile_context>
chip_gen: v7x
topology: tpu7x:2x2x1
jax: 0.10.0
libtpu: 0.0.40
codegen_flags: <defaults>
</compile_context>

<pallas_src>
import jax
import jax.numpy as jnp
import numpy as np
from jax.experimental import pallas as pl
from jax.experimental.pallas import tpu as pltpu


# ----------------------------------------------------------------------------
# Hardware-aware sizing helpers
# ----------------------------------------------------------------------------
def _device_kind():
    try:
        return jax.devices()[0].device_kind.lower()
    except Exception:
        return ""


def _physical_vmem_bytes():
    try:
        return int(pltpu.get_tpu_info().vmem_capacity_bytes)
    except Exception:
        pass
    kind = _device_kind()
    if "v7" in kind or "7x" in kind:
        return 64 * 1024 * 1024
    return 128 * 1024 * 1024


def _batch_axis_semantics(grid_size):
    kind = _device_kind()
    # v7x has 2 TensorCores per chip: shard the batch grid axis across them.
    if grid_size > 1 and ("v7" in kind or "7x" in kind):
        return (pltpu.CORE_PARALLEL,)
    return ("parallel",)


def _choose_batch_tile(B, S, H, Nt, vmem_limit_bytes):
    """Batch elements per grid step: aim for Bt*S >= 256 MXU rows, cap by VMEM,
    and keep Bt a divisor of B (so no ragged / padded blocks)."""
    target = max(1, -(-256 // S))                      # ceil(256 / S)
    # Rough per-element footprint: double-buffered bf16 embeddings + double-
    # buffered f32 logits/probs outputs + ~4 live (S, Nt) f32 intermediates.
    per_elem = 2 * (S * H * 2) + 2 * (2 * S * Nt * 4) + 4 * (S * Nt * 4)
    cap = max(1, (vmem_limit_bytes // 2) // max(per_elem, 1))
    bt = B
    for d in range(1, B + 1):
        if B % d == 0 and d >= target:
            bt = d
            break
    bt = min(bt, cap)
    while B % bt:
        bt -= 1
    return max(1, bt)


# ----------------------------------------------------------------------------
# Kernel
# ----------------------------------------------------------------------------
def _make_kernel(num_correct_tags, num_detect_tags, additional_confidence,
                 detect_pad_id, correct_pad_id, detect_incorrect_id,
                 correct_keep_id):
    Nc = int(num_correct_tags)
    Nd = int(num_detect_tags)
    Nt = Nc + Nd

    def kernel(emb_ref, w_ref, b_ref, side_ref,
               logits_ref, probs_ref, scal_ref):
        Bt, S, H = emb_ref.shape
        M = Bt * S

        # --- single fused projection: both heads, all Bt elements, one matmul ---
        x2 = emb_ref[...].reshape(M, H)                          # (M, H) bf16
        logits2 = jnp.dot(x2, w_ref[...],
                          preferred_element_type=jnp.float32) + b_ref[...]
        logits = logits2.reshape(Bt, S, Nt)                      # (Bt, S, Nt) f32

        # Store logits early: lets the output DMA overlap the softmax math and
        # retires the fused-logit vregs sooner.
        logits_ref[...] = logits

        # --- packed per-token side data (one DMA pipeline) ---
        side = side_ref[...]                                     # (Bt, S, 8) f32
        maskf = side[:, :, 0:1]                                  # (Bt, S, 1)
        ctag = side[:, :, 1:2].astype(jnp.int32)                 # (Bt, S, 1)
        dtag = side[:, :, 2:3].astype(jnp.int32)                 # (Bt, S, 1)

        # One iota shared by both heads.
        col = jax.lax.broadcasted_iota(jnp.int32, (Bt, S, Nt), 2)

        def head(lg, onehot_col, tgt_col, valid):
            # Softmax and CE share max / exp / sum-exp.
            m = jnp.max(lg, axis=-1, keepdims=True)              # (Bt,S,1)
            shifted = lg - m
            e = jnp.exp(shifted)                                 # (Bt,S,N)
            se = jnp.sum(e, axis=-1, keepdims=True)              # (Bt,S,1)
            probs = e * pl.reciprocal(se, approx=False)
            onehot = (onehot_col == tgt_col).astype(jnp.float32)
            # ce = lse - tgt_logit = log(se) - (tgt_logit - m)
            ce = jnp.log(se) - jnp.sum(shifted * onehot, axis=-1, keepdims=True)
            loss_sum = jnp.sum(ce * valid, axis=1, keepdims=True)   # (Bt,1,1)
            count = jnp.sum(valid, axis=1, keepdims=True)           # (Bt,1,1)
            return probs, loss_sum, count

        c_valid = (ctag != correct_pad_id).astype(jnp.float32)
        d_valid = (dtag != detect_pad_id).astype(jnp.float32)

        c_probs, c_loss, c_cnt = head(logits[:, :, :Nc], col[:, :, :Nc],
                                      ctag, c_valid)
        d_probs, d_loss, d_cnt = head(logits[:, :, Nc:], col[:, :, Nc:],
                                      dtag + Nc, d_valid)

        # --- max error probability per batch element ---
        inc = d_probs[:, :, detect_incorrect_id:detect_incorrect_id + 1]
        maxerr = jnp.max(inc * maskf, axis=1, keepdims=True)     # (Bt,1,1)

        # --- additional confidence on the $KEEP column (post-softmax) ---
        if additional_confidence != 0.0:
            kcol = jax.lax.broadcasted_iota(jnp.int32, (1, 1, Nc), 2)
            keep_add = jnp.where(kcol == correct_keep_id,
                                 jnp.float32(additional_confidence),
                                 jnp.float32(0.0))               # (1,1,Nc)
            c_probs = c_probs + keep_add

        # --- fused, lane-dense probability slab (single output pipeline) ---
        probs_ref[:, :, :Nc] = c_probs
        probs_ref[:, :, Nc:] = d_probs

        # --- pack the 5 per-batch scalars into one 8-lane row per element ---
        lane = jax.lax.broadcasted_iota(jnp.int32, (Bt, 1, 8), 2)
        zero = jnp.float32(0.0)
        scal_ref[...] = (jnp.where(lane == 0, maxerr, zero)
                         + jnp.where(lane == 1, c_loss, zero)
                         + jnp.where(lane == 2, c_cnt, zero)
                         + jnp.where(lane == 3, d_loss, zero)
                         + jnp.where(lane == 4, d_cnt, zero))

    return kernel


# ----------------------------------------------------------------------------
# Wrapper
# ----------------------------------------------------------------------------
def gector_forward(embeddings, word_mask, correct_tag_ids, detect_tag_ids,
                   w_correct, b_correct, w_detect, b_detect, *,
                   additional_confidence, detect_pad_id, correct_pad_id,
                   detect_incorrect_id, correct_keep_id):
    """GECToR head forward.  embeddings: [B,S,H], word_mask: [B,S],
    tag ids: [B,S] int.  Returns the same dict the torch module returns."""
    B, S, H = embeddings.shape
    Nc = w_correct.shape[1]
    Nd = w_detect.shape[1]
    Nt = Nc + Nd

    # bf16 MXU operands; accumulation stays f32 inside the kernel.
    emb_bf16 = embeddings.astype(jnp.bfloat16)
    w_cat = jnp.concatenate([w_correct, w_detect], axis=1).astype(jnp.bfloat16)
    b_cat = jnp.concatenate([b_correct, b_detect]).reshape(1, Nt).astype(
        jnp.float32)

    # Pack word_mask + both tag-id planes into one lane-padded side array so
    # they ride a single BlockSpec / DMA pipeline.  (tag ids < 2^24 -> exact.)
    side = jnp.zeros((B, S, 8), jnp.float32)
    side = side.at[:, :, 0].set(word_mask.astype(jnp.float32))
    side = side.at[:, :, 1].set(correct_tag_ids.astype(jnp.float32))
    side = side.at[:, :, 2].set(detect_tag_ids.astype(jnp.float32))

    vmem_limit = int(min(96 * 1024 * 1024, (_physical_vmem_bytes() * 3) // 4))
    Bt = _choose_batch_tile(B, S, H, Nt, vmem_limit)
    grid_b = B // Bt

    kernel = _make_kernel(Nc, Nd, float(additional_confidence),
                          int(detect_pad_id), int(correct_pad_id),
                          int(detect_incorrect_id), int(correct_keep_id))

    out_shapes = (
        jax.ShapeDtypeStruct((B, S, Nt), jnp.float32),   # fused logits
        jax.ShapeDtypeStruct((B, S, Nt), jnp.float32),   # fused probs
        jax.ShapeDtypeStruct((B, 1, 8), jnp.float32),    # packed per-batch scalars
    )

    per_block = lambda i: (i, 0, 0)
    shared2d = lambda i: (0, 0)
    single_buf = pl.Buffered(1)   # grid-invariant operands: one resident copy

    grid_spec = pltpu.PrefetchScalarGridSpec(
        num_scalar_prefetch=0,
        grid=(grid_b,),
        in_specs=[
            pl.BlockSpec((Bt, S, H), per_block),                          # embeddings
            pl.BlockSpec((H, Nt), shared2d, pipeline_mode=single_buf),    # W_cat
            pl.BlockSpec((1, Nt), shared2d, pipeline_mode=single_buf),    # b_cat
            pl.BlockSpec((Bt, S, 8), per_block),                          # packed side
        ],
        out_specs=[
            pl.BlockSpec((Bt, S, Nt), per_block),
            pl.BlockSpec((Bt, S, Nt), per_block),
            pl.BlockSpec((Bt, 1, 8), per_block),
        ],
    )

    logits_cat, probs_cat, scal = pl.pallas_call(
        kernel,
        out_shape=out_shapes,
        grid_spec=grid_spec,
        compiler_params=pltpu.CompilerParams(
            dimension_semantics=_batch_axis_semantics(grid_b),
            vmem_limit_bytes=vmem_limit),
    )(emb_bf16, w_cat, b_cat, side)

    c_logits = logits_cat[:, :, :Nc]
    d_logits = logits_cat[:, :, Nc:]
    c_probs = probs_cat[:, :, :Nc]
    d_probs = probs_cat[:, :, Nc:]

    # CrossEntropyLoss(ignore_index=...) is a mean over all non-ignored
    # positions in the flattened (B*S) batch -> finalize the reduction here.
    # (If every target is the pad id this divides by zero, same as torch.)
    maxerr = scal[:, 0, 0]
    correct_loss = jnp.sum(scal[:, 0, 1]) / jnp.sum(scal[:, 0, 2])
    detect_loss = jnp.sum(scal[:, 0, 3]) / jnp.sum(scal[:, 0, 4])
    total_loss = correct_loss + detect_loss

    return {
        "logits_labels": c_logits,
        "logits_d_tags": d_logits,
        "class_probabilities_labels": c_probs,
        "class_probabilities_d_tags": d_probs,
        "max_error_probability": maxerr,
        "loss": total_loss,
    }


# ----------------------------------------------------------------------------
# Pure-JAX reference (mirrors the torch forward)
# ----------------------------------------------------------------------------
def _reference(embeddings, word_mask, ctags, dtags, wc, bc, wd, bd, *,
               additional_confidence, detect_pad_id, correct_pad_id,
               detect_incorrect_id, correct_keep_id):
    hi = jax.lax.Precision.HIGHEST
    c_logits = jnp.einsum("bsh,hn->bsn", embeddings, wc, precision=hi) + bc
    d_logits = jnp.einsum("bsh,hn->bsn", embeddings, wd, precision=hi) + bd
    c_probs = jax.nn.softmax(c_logits, axis=-1)
    d_probs = jax.nn.softmax(d_logits, axis=-1)
    inc = d_probs[:, :, detect_incorrect_id] * word_mask
    maxerr = jnp.max(inc, axis=-1)
    if additional_confidence != 0:
        c_probs = c_probs.at[:, :, correct_keep_id].add(additional_confidence)

    def ce(logits, tgt, pad):
        n = logits.shape[-1]
        lf = logits.reshape(-1, n)
        tf = tgt.reshape(-1)
        lse = jax.scipy.special.logsumexp(lf, axis=-1)
        tl = jnp.take_along_axis(lf, tf[:, None], axis=-1)[:, 0]
        valid = (tf != pad).astype(jnp.float32)
        return jnp.sum((lse - tl) * valid) / jnp.sum(valid)

    loss = (ce(c_logits, ctags, correct_pad_id) +
            ce(d_logits, dtags, detect_pad_id))
    return c_logits, d_logits, c_probs, d_probs, maxerr, loss


if __name__ == "__main__":
    # small config
    B, S, H = 2, 8, 32
    num_detect_tags, num_correct_tags = 4, 16
    detect_pad_id, correct_pad_id = 3, 15
    detect_incorrect_id, correct_keep_id = 1, 0
    additional_confidence = 0.2

    key = jax.random.PRNGKey(0)
    k_emb, k_wc, k_bc, k_wd, k_bd, k_ct, k_dt, k_m = jax.random.split(key, 8)

    embeddings = jax.random.normal(k_emb, (B, S, H), dtype=jnp.float32)
    w_correct = 0.05 * jax.random.normal(k_wc, (H, num_correct_tags), jnp.float32)
    b_correct = 0.01 * jax.random.normal(k_bc, (num_correct_tags,), jnp.float32)
    w_detect = 0.05 * jax.random.normal(k_wd, (H, num_detect_tags), jnp.float32)
    b_detect = 0.01 * jax.random.normal(k_bd, (num_detect_tags,), jnp.float32)

    correct_tag_ids = jax.random.randint(k_ct, (B, S), 0, num_correct_tags,
                                         dtype=jnp.int32)
    detect_tag_ids = jax.random.randint(k_dt, (B, S), 0, num_detect_tags,
                                        dtype=jnp.int32)
    word_mask = (jax.random.uniform(k_m, (B, S)) > 0.2).astype(jnp.float32)

    cfg = dict(additional_confidence=additional_confidence,
               detect_pad_id=detect_pad_id, correct_pad_id=correct_pad_id,
               detect_incorrect_id=detect_incorrect_id,
               correct_keep_id=correct_keep_id)

    out = gector_forward(embeddings, word_mask, correct_tag_ids,
                         detect_tag_ids, w_correct, b_correct,
                         w_detect, b_detect, **cfg)
    jax.block_until_ready(out)

    # correctness check vs pure-JAX reference, on the same bf16-quantized MXU
    # operands the kernel consumes (products are then exact in f32).
    emb_q = embeddings.astype(jnp.bfloat16).astype(jnp.float32)
    wc_q = w_correct.astype(jnp.bfloat16).astype(jnp.float32)
    wd_q = w_detect.astype(jnp.bfloat16).astype(jnp.float32)
    ref = _reference(emb_q, word_mask, correct_tag_ids, detect_tag_ids,
                     wc_q, b_correct, wd_q, b_detect, **cfg)
    names = ["logits_labels", "logits_d_tags", "class_probabilities_labels",
             "class_probabilities_d_tags", "max_error_probability", "loss"]
    for name, r in zip(names, ref):
        np.testing.assert_allclose(np.asarray(out[name]), np.asarray(r),
                                   rtol=1e-3, atol=1e-4)

    print("KERNEL_OK")
</pallas_src>

<mosaic_0001>
module attributes {stable_mosaic.version = 11 : i64} {
  func.func @kernel(%arg0: i32, %arg1: memref<2x8x32xbf16, #tpu.memory_space<vmem>>, %arg2: memref<32x20xbf16, #tpu.memory_space<vmem>>, %arg3: memref<1x20xf32, #tpu.memory_space<vmem>>, %arg4: memref<2x8x8xf32, #tpu.memory_space<vmem>>, %arg5: memref<2x8x20xf32, #tpu.memory_space<vmem>>, %arg6: memref<2x8x20xf32, #tpu.memory_space<vmem>>, %arg7: memref<2x1x8xf32, #tpu.memory_space<vmem>>) attributes {dimension_semantics = [#tpu.dimension_semantics<parallel>], iteration_bounds = array<i64: 1>, scalar_prefetch = 0 : i64, scratch_operands = 0 : i64, tpu.core_type = #tpu.core_type<tc>, window_params = [{transform_indices = @transform_0, window_bounds = array<i64: 2, 8, 32>}, {pipeline_mode = #tpu.pipeline_mode<synchronous>, transform_indices = @transform_1, window_bounds = array<i64: 32, 20>}, {pipeline_mode = #tpu.pipeline_mode<synchronous>, transform_indices = @transform_2, window_bounds = array<i64: 1, 20>}, {transform_indices = @transform_3, window_bounds = array<i64: 2, 8, 8>}, {transform_indices = @transform_4, window_bounds = array<i64: 2, 8, 20>}, {transform_indices = @transform_5, window_bounds = array<i64: 2, 8, 20>}, {transform_indices = @transform_6, window_bounds = array<i64: 2, 1, 8>}]} {
    %c0 = arith.constant 0 : index
    %c0_0 = arith.constant 0 : index
    %c0_1 = arith.constant 0 : index
    %0 = vector.load %arg1[%c0, %c0_0, %c0_1] : memref<2x8x32xbf16, #tpu.memory_space<vmem>>, vector<2x8x32xbf16>
    %1 = vector.shape_cast %0 : vector<2x8x32xbf16> to vector<16x32xbf16>
    %c0_2 = arith.constant 0 : index
    %c0_3 = arith.constant 0 : index
    %2 = vector.load %arg2[%c0_2, %c0_3] : memref<32x20xbf16, #tpu.memory_space<vmem>>, vector<32x20xbf16>
    %cst = arith.constant dense<0.000000e+00> : vector<16x20xf32>
    %3 = tpu.matmul %1, %2, %cst {dimension_numbers = #tpu.dot_dimension_numbers<[1], [0], [0], [1], [0, 0, 1, 1], [], []>} : vector<16x32xbf16>, vector<32x20xbf16>, vector<16x20xf32> -> vector<16x20xf32>
    %c0_4 = arith.constant 0 : index
    %c0_5 = arith.constant 0 : index
    %4 = vector.load %arg3[%c0_4, %c0_5] : memref<1x20xf32, #tpu.memory_space<vmem>>, vector<1x20xf32>
    %5 = vector.broadcast %4 : vector<1x20xf32> to vector<16x20xf32>
    %6 = arith.addf %3, %5 : vector<16x20xf32>
    %7 = vector.shape_cast %6 : vector<16x20xf32> to vector<2x8x20xf32>
    %c0_6 = arith.constant 0 : index
    %c0_7 = arith.constant 0 : index
    %c0_8 = arith.constant 0 : index
    %8 = vector.load %arg5[%c0_6, %c0_7, %c0_8] : memref<2x8x20xf32, #tpu.memory_space<vmem>>, vector<2x8x20xf32>
    tpu.vector_store %arg5[%c0_6, %c0_7, %c0_8], %7 {strides = array<i32>} : memref<2x8x20xf32, #tpu.memory_space<vmem>>, vector<2x8x20xf32>,
    %c0_9 = arith.constant 0 : index
    %c0_10 = arith.constant 0 : index
    %c0_11 = arith.constant 0 : index
    %9 = vector.load %arg4[%c0_9, %c0_10, %c0_11] : memref<2x8x8xf32, #tpu.memory_space<vmem>>, vector<2x8x8xf32>
    %10 = vector.extract_strided_slice %9 {offsets = [0, 0, 0], sizes = [2, 8, 1], strides = [1, 1, 1]} : vector<2x8x8xf32> to vector<2x8x1xf32>
    %11 = vector.extract_strided_slice %9 {offsets = [0, 0, 1], sizes = [2, 8, 1], strides = [1, 1, 1]} : vector<2x8x8xf32> to vector<2x8x1xf32>
    %12 = arith.fptosi %11 : vector<2x8x1xf32> to vector<2x8x1xi32>
    %13 = vector.extract_strided_slice %9 {offsets = [0, 0, 2], sizes = [2, 8, 1], strides = [1, 1, 1]} : vector<2x8x8xf32> to vector<2x8x1xf32>
    %14 = arith.fptosi %13 : vector<2x8x1xf32> to vector<2x8x1xi32>
    %15 = tpu.iota {dimensions = array<i32: 2>} : vector<2x8x20xi32>
    %c15_i32 = arith.constant 15 : i32
    %16 = vector.broadcast %c15_i32 : i32 to vector<2x8x1xi32>
    %17 = arith.cmpi ne, %12, %16 : vector<2x8x1xi32>
    %18 = arith.extui %17 : vector<2x8x1xi1> to vector<2x8x1xi32>
    %19 = arith.sitofp %18 : vector<2x8x1xi32> to vector<2x8x1xf32>
    %c3_i32 = arith.constant 3 : i32
    %20 = vector.broadcast %c3_i32 : i32 to vector<2x8x1xi32>
    %21 = arith.cmpi ne, %14, %20 : vector<2x8x1xi32>
    %22 = arith.extui %21 : vector<2x8x1xi1> to vector<2x8x1xi32>
    %23 = arith.sitofp %22 : vector<2x8x1xi32> to vector<2x8x1xf32>
    %24 = vector.extract_strided_slice %7 {offsets = [0, 0, 0], sizes = [2, 8, 16], strides = [1, 1, 1]} : vector<2x8x20xf32> to vector<2x8x16xf32>
    %25 = vector.extract_strided_slice %15 {offsets = [0, 0, 0], sizes = [2, 8, 16], strides = [1, 1, 1]} : vector<2x8x20xi32> to vector<2x8x16xi32>
    %cst_12 = arith.constant dense<0xFF800000> : vector<2x8xf32>
    %26 = vector.multi_reduction <maximumf>, %24, %cst_12 [2] : vector<2x8x16xf32> to vector<2x8xf32>
    %27 = vector.shape_cast %26 : vector<2x8xf32> to vector<2x8x1xf32>
    %28 = vector.broadcast %27 : vector<2x8x1xf32> to vector<2x8x16xf32>
    %29 = arith.subf %24, %28 : vector<2x8x16xf32>
    %30 = math.exp %29 : vector<2x8x16xf32>
    %cst_13 = arith.constant dense<0.000000e+00> : vector<2x8xf32>
    %31 = vector.multi_reduction <add>, %30, %cst_13 [2] : vector<2x8x16xf32> to vector<2x8xf32>
    %32 = vector.shape_cast %31 : vector<2x8xf32> to vector<2x8x1xf32>
    %33 = tpu.reciprocal %32 : vector<2x8x1xf32> -> vector<2x8x1xf32>
    %34 = vector.broadcast %33 : vector<2x8x1xf32> to vector<2x8x16xf32>
    %35 = arith.mulf %30, %34 : vector<2x8x16xf32>
    %36 = vector.broadcast %12 : vector<2x8x1xi32> to vector<2x8x16xi32>
    %37 = arith.cmpi eq, %25, %36 : vector<2x8x16xi32>
    %38 = arith.extui %37 : vector<2x8x16xi1> to vector<2x8x16xi32>
    %39 = arith.sitofp %38 : vector<2x8x16xi32> to vector<2x8x16xf32>
    %40 = math.log %32 : vector<2x8x1xf32>
    %41 = arith.mulf %29, %39 : vector<2x8x16xf32>
    %cst_14 = arith.constant dense<0.000000e+00> : vector<2x8xf32>
    %42 = vector.multi_reduction <add>, %41, %cst_14 [2] : vector<2x8x16xf32> to vector<2x8xf32>
    %43 = vector.shape_cast %42 : vector<2x8xf32> to vector<2x8x1xf32>
    %44 = arith.subf %40, %43 : vector<2x8x1xf32>
    %45 = arith.mulf %44, %19 : vector<2x8x1xf32>
    %cst_15 = arith.constant dense<0.000000e+00> : vector<2x1xf32>
    %46 = vector.multi_reduction <add>, %45, %cst_15 [1] : vector<2x8x1xf32> to vector<2x1xf32>
    %47 = vector.shape_cast %46 : vector<2x1xf32> to vector<2x1x1xf32>
    %cst_16 = arith.constant dense<0.000000e+00> : vector<2x1xf32>
    %48 = vector.multi_reduction <add>, %19, %cst_16 [1] : vector<2x8x1xf32> to vector<2x1xf32>
    %49 = vector.shape_cast %48 : vector<2x1xf32> to vector<2x1x1xf32>
    %50 = vector.extract_strided_slice %7 {offsets = [0, 0, 16], sizes = [2, 8, 4], strides = [1, 1, 1]} : vector<2x8x20xf32> to vector<2x8x4xf32>
    %51 = vector.extract_strided_slice %15 {offsets = [0, 0, 16], sizes = [2, 8, 4], strides = [1, 1, 1]} : vector<2x8x20xi32> to vector<2x8x4xi32>
    %c16_i32 = arith.constant 16 : i32
    %52 = vector.broadcast %c16_i32 : i32 to vector<2x8x1xi32>
    %53 = arith.addi %14, %52 : vector<2x8x1xi32>
    %cst_17 = arith.constant dense<0xFF800000> : vector<2x8xf32>
    %54 = vector.multi_reduction <maximumf>, %50, %cst_17 [2] : vector<2x8x4xf32> to vector<2x8xf32>
    %55 = vector.shape_cast %54 : vector<2x8xf32> to vector<2x8x1xf32>
    %56 = vector.broadcast %55 : vector<2x8x1xf32> to vector<2x8x4xf32>
    %57 = arith.subf %50, %56 : vector<2x8x4xf32>
    %58 = math.exp %57 : vector<2x8x4xf32>
    %cst_18 = arith.constant dense<0.000000e+00> : vector<2x8xf32>
    %59 = vector.multi_reduction <add>, %58, %cst_18 [2] : vector<2x8x4xf32> to vector<2x8xf32>
    %60 = vector.shape_cast %59 : vector<2x8xf32> to vector<2x8x1xf32>
    %61 = tpu.reciprocal %60 : vector<2x8x1xf32> -> vector<2x8x1xf32>
    %62 = vector.broadcast %61 : vector<2x8x1xf32> to vector<2x8x4xf32>
    %63 = arith.mulf %58, %62 : vector<2x8x4xf32>
    %64 = vector.broadcast %53 : vector<2x8x1xi32> to vector<2x8x4xi32>
    %65 = arith.cmpi eq, %51, %64 : vector<2x8x4xi32>
    %66 = arith.extui %65 : vector<2x8x4xi1> to vector<2x8x4xi32>
    %67 = arith.sitofp %66 : vector<2x8x4xi32> to vector<2x8x4xf32>
    %68 = math.log %60 : vector<2x8x1xf32>
    %69 = arith.mulf %57, %67 : vector<2x8x4xf32>
    %cst_19 = arith.constant dense<0.000000e+00> : vector<2x8xf32>
    %70 = vector.multi_reduction <add>, %69, %cst_19 [2] : vector<2x8x4xf32> to vector<2x8xf32>
    %71 = vector.shape_cast %70 : vector<2x8xf32> to vector<2x8x1xf32>
    %72 = arith.subf %68, %71 : vector<2x8x1xf32>
    %73 = arith.mulf %72, %23 : vector<2x8x1xf32>
    %cst_20 = arith.constant dense<0.000000e+00> : vector<2x1xf32>
    %74 = vector.multi_reduction <add>, %73, %cst_20 [1] : vector<2x8x1xf32> to vector<2x1xf32>
    %75 = vector.shape_cast %74 : vector<2x1xf32> to vector<2x1x1xf32>
    %cst_21 = arith.constant dense<0.000000e+00> : vector<2x1xf32>
    %76 = vector.multi_reduction <add>, %23, %cst_21 [1] : vector<2x8x1xf32> to vector<2x1xf32>
    %77 = vector.shape_cast %76 : vector<2x1xf32> to vector<2x1x1xf32>
    %78 = vector.extract_strided_slice %63 {offsets = [0, 0, 1], sizes = [2, 8, 1], strides = [1, 1, 1]} : vector<2x8x4xf32> to vector<2x8x1xf32>
    %79 = arith.mulf %78, %10 : vector<2x8x1xf32>
    %cst_22 = arith.constant dense<0xFF800000> : vector<2x1xf32>
    %80 = vector.multi_reduction <maximumf>, %79, %cst_22 [1] : vector<2x8x1xf32> to vector<2x1xf32>
    %81 = vector.shape_cast %80 : vector<2x1xf32> to vector<2x1x1xf32>
    %82 = tpu.iota {dimensions = array<i32: 2>} : vector<1x1x16xi32>
    %c0_i32 = arith.constant 0 : i32
    %83 = vector.broadcast %c0_i32 : i32 to vector<1x1x16xi32>
    %84 = arith.cmpi eq, %82, %83 : vector<1x1x16xi32>
    %cst_23 = arith.constant 2.000000e-01 : f32
    %cst_24 = arith.constant 0.000000e+00 : f32
    %85 = vector.broadcast %cst_23 : f32 to vector<1x1x16xf32>
    %86 = vector.broadcast %cst_24 : f32 to vector<1x1x16xf32>
    %87 = arith.select %84, %85, %86 : vector<1x1x16xi1>, vector<1x1x16xf32>
    %88 = vector.broadcast %87 : vector<1x1x16xf32> to vector<2x8x16xf32>
    %89 = arith.addf %35, %88 : vector<2x8x16xf32>
    %c0_25 = arith.constant 0 : index
    %c0_26 = arith.constant 0 : index
    %c0_27 = arith.constant 0 : index
    %90 = vector.load %arg6[%c0_25, %c0_26, %c0_27] : memref<2x8x20xf32, #tpu.memory_space<vmem>>, vector<2x8x16xf32>
    tpu.vector_store %arg6[%c0_25, %c0_26, %c0_27], %89 {strides = array<i32>} : memref<2x8x20xf32, #tpu.memory_space<vmem>>, vector<2x8x16xf32>,
    %c0_28 = arith.constant 0 : index
    %c0_29 = arith.constant 0 : index
    %c16 = arith.constant 16 : index
    %91 = vector.load %arg6[%c0_28, %c0_29, %c16] : memref<2x8x20xf32, #tpu.memory_space<vmem>>, vector<2x8x4xf32>
    tpu.vector_store %arg6[%c0_28, %c0_29, %c16], %63 {strides = array<i32>} : memref<2x8x20xf32, #tpu.memory_space<vmem>>, vector<2x8x4xf32>,
    %92 = tpu.iota {dimensions = array<i32: 2>} : vector<2x1x8xi32>
    %c0_i32_30 = arith.constant 0 : i32
    %93 = vector.broadcast %c0_i32_30 : i32 to vector<2x1x8xi32>
    %94 = arith.cmpi eq, %92, %93 : vector<2x1x8xi32>
    %cst_31 = arith.constant 0.000000e+00 : f32
    %95 = vector.shape_cast %81 : vector<2x1x1xf32> to vector<2x1x1xf32>
    %96 = vector.broadcast %95 : vector<2x1x1xf32> to vector<2x1x8xf32>
    %97 = vector.broadcast %cst_31 : f32 to vector<2x1x8xf32>
    %98 = arith.select %94, %96, %97 : vector<2x1x8xi1>, vector<2x1x8xf32>
    %c1_i32 = arith.constant 1 : i32
    %99 = vector.broadcast %c1_i32 : i32 to vector<2x1x8xi32>
    %100 = arith.cmpi eq, %92, %99 : vector<2x1x8xi32>
    %cst_32 = arith.constant 0.000000e+00 : f32
    %101 = vector.shape_cast %47 : vector<2x1x1xf32> to vector<2x1x1xf32>
    %102 = vector.broadcast %101 : vector<2x1x1xf32> to vector<2x1x8xf32>
    %103 = vector.broadcast %cst_32 : f32 to vector<2x1x8xf32>
    %104 = arith.select %100, %102, %103 : vector<2x1x8xi1>, vector<2x1x8xf32>
    %105 = arith.addf %98, %104 : vector<2x1x8xf32>
    %c2_i32 = arith.constant 2 : i32
    %106 = vector.broadcast %c2_i32 : i32 to vector<2x1x8xi32>
    %107 = arith.cmpi eq, %92, %106 : vector<2x1x8xi32>
    %cst_33 = arith.constant 0.000000e+00 : f32
    %108 = vector.shape_cast %49 : vector<2x1x1xf32> to vector<2x1x1xf32>
    %109 = vector.broadcast %108 : vector<2x1x1xf32> to vector<2x1x8xf32>
    %110 = vector.broadcast %cst_33 : f32 to vector<2x1x8xf32>
    %111 = arith.select %107, %109, %110 : vector<2x1x8xi1>, vector<2x1x8xf32>
    %112 = arith.addf %105, %111 : vector<2x1x8xf32>
    %c3_i32_34 = arith.constant 3 : i32
    %113 = vector.broadcast %c3_i32_34 : i32 to vector<2x1x8xi32>
    %114 = arith.cmpi eq, %92, %113 : vector<2x1x8xi32>
    %cst_35 = arith.constant 0.000000e+00 : f32
    %115 = vector.shape_cast %75 : vector<2x1x1xf32> to vector<2x1x1xf32>
    %116 = vector.broadcast %115 : vector<2x1x1xf32> to vector<2x1x8xf32>
    %117 = vector.broadcast %cst_35 : f32 to vector<2x1x8xf32>
    %118 = arith.select %114, %116, %117 : vector<2x1x8xi1>, vector<2x1x8xf32>
    %119 = arith.addf %112, %118 : vector<2x1x8xf32>
    %c4_i32 = arith.constant 4 : i32
    %120 = vector.broadcast %c4_i32 : i32 to vector<2x1x8xi32>
    %121 = arith.cmpi eq, %92, %120 : vector<2x1x8xi32>
    %cst_36 = arith.constant 0.000000e+00 : f32
    %122 = vector.shape_cast %77 : vector<2x1x1xf32> to vector<2x1x1xf32>
    %123 = vector.broadcast %122 : vector<2x1x1xf32> to vector<2x1x8xf32>
    %124 = vector.broadcast %cst_36 : f32 to vector<2x1x8xf32>
    %125 = arith.select %121, %123, %124 : vector<2x1x8xi1>, vector<2x1x8xf32>
    %126 = arith.addf %119, %125 : vector<2x1x8xf32>
    %c0_37 = arith.constant 0 : index
    %c0_38 = arith.constant 0 : index
    %c0_39 = arith.constant 0 : index
    %127 = vector.load %arg7[%c0_37, %c0_38, %c0_39] : memref<2x1x8xf32, #tpu.memory_space<vmem>>, vector<2x1x8xf32>
    tpu.vector_store %arg7[%c0_37, %c0_38, %c0_39], %126 {strides = array<i32>} : memref<2x1x8xf32, #tpu.memory_space<vmem>>, vector<2x1x8xf32>,
    return
  }
  func.func @transform_0(%arg0: i32) -> (i32, i32, i32) {
    %c0_i32 = arith.constant 0 : i32
    %c0_i32_0 = arith.constant 0 : i32
    %c0_i32_1 = arith.constant 0 : i32
    return %arg0, %c0_i32, %c0_i32_0 : i32, i32, i32
  }
  func.func @transform_1(%arg0: i32) -> (i32, i32) {
    %c0_i32 = arith.constant 0 : i32
    %c0_i32_0 = arith.constant 0 : i32
    %c0_i32_1 = arith.constant 0 : i32
    return %c0_i32, %c0_i32_0 : i32, i32
  }
  func.func @transform_2(%arg0: i32) -> (i32, i32) {
    %c0_i32 = arith.constant 0 : i32
    %c0_i32_0 = arith.constant 0 : i32
    %c0_i32_1 = arith.constant 0 : i32
    return %c0_i32, %c0_i32_0 : i32, i32
  }
  func.func @transform_3(%arg0: i32) -> (i32, i32, i32) {
    %c0_i32 = arith.constant 0 : i32
    %c0_i32_0 = arith.constant 0 : i32
    %c0_i32_1 = arith.constant 0 : i32
    return %arg0, %c0_i32, %c0_i32_0 : i32, i32, i32
  }
  func.func @transform_4(%arg0: i32) -> (i32, i32, i32) {
    %c0_i32 = arith.constant 0 : i32
    %c0_i32_0 = arith.constant 0 : i32
    %c0_i32_1 = arith.constant 0 : i32
    return %arg0, %c0_i32, %c0_i32_0 : i32, i32, i32
  }
  func.func @transform_5(%arg0: i32) -> (i32, i32, i32) {
    %c0_i32 = arith.constant 0 : i32
    %c0_i32_0 = arith.constant 0 : i32
    %c0_i32_1 = arith.constant 0 : i32
    return %arg0, %c0_i32, %c0_i32_0 : i32, i32, i32
  }
  func.func @transform_6(%arg0: i32) -> (i32, i32, i32) {
    %c0_i32 = arith.constant 0 : i32
    %c0_i32_0 = arith.constant 0 : i32
    %c0_i32_1 = arith.constant 0 : i32
    return %arg0, %c0_i32, %c0_i32_0 : i32, i32, i32
  }
}

</mosaic_0001>

<llo_original>
// kernel: tpu_custom_call.1
$region0: #{tpu_custom_call.1}
  #allocation0 [shape = 'u32[]', space=smem, size = 0x4, offset = 0x4, fixed_abs, tag = 'smem constant byte address 0x4 - core index']
  #allocation1 [shape = 'u32[144,128]{1,0:T(1,128)}', space=vmem, size = 0x12000, scoped, tag = 'internal scratch']
  %s0 = inlined_call_operand.hbm [shape: bf16[2,8,32], index: 0, kind: input, shape index: {}]
  %s1 = inlined_call_operand.hbm [shape: bf16[32,20], index: 1, kind: input, shape index: {}]
  %s2 = inlined_call_operand.hbm [shape: f32[1,20], index: 2, kind: input, shape index: {}]
  %s3 = inlined_call_operand.hbm [shape: f32[2,8,8], index: 3, kind: input, shape index: {}]
  %s4 = inlined_call_operand.hbm [shape: f32[2,8,20], index: 4, kind: output, shape index: {0}]
  %s5 = inlined_call_operand.hbm [shape: f32[2,8,20], index: 5, kind: output, shape index: {1}]
  %s6 = inlined_call_operand.hbm [shape: f32[2,1,8], index: 6, kind: output, shape index: {2}]
  %7 = xla_tuple %s4, %s5, %s6
  %s8 = sld [smem:[#allocation0]]
  $region58: #{tpu_custom_call.1} parent=0
    _
  %s10 = ssub.s32 1, %s8
  %s11 = scalar_select 0, %s10, %s8
  $region1: #{tpu_custom_call.1} parent=0
    #allocation2 [shape = 'u8[4096]{0}', space=vmem, size = 0x1000, scoped, tag = 'input window, operand 0, single buffered']
    #allocation3 [shape = 's32[1]{0}', space=sflag, size = 0x4, scoped, tag = 'scoped memory for tpu_custom_call.1']
    #allocation4 [shape = 's32[1]{0}', space=sflag, size = 0x4, scoped, tag = 'scoped memory for tpu_custom_call.1']
    #allocation5 [shape = 'u8[8192]{0}', space=vmem, size = 0x2000, scoped, tag = 'input window, operand 1, single buffered']
    #allocation6 [shape = 's32[1]{0}', space=sflag, size = 0x4, scoped, tag = 'scoped memory for tpu_custom_call.1']
    #allocation7 [shape = 'u8[512]{0}', space=vmem, size = 0x400, scoped, tag = 'input window, operand 2, single buffered']
    #allocation8 [shape = 'u8[8192]{0}', space=vmem, size = 0x2000, scoped, tag = 'input window, operand 3, single buffered']
    #allocation9 [shape = 's32[1]{0}', space=sflag, size = 0x4, scoped, tag = 'scoped memory for tpu_custom_call.1']
    #allocation10 [shape = 'u8[8192]{0}', space=vmem, size = 0x2000, scoped, tag = 'output window, operand 0, single buffered']
    #allocation11 [shape = 'u8[8192]{0}', space=vmem, size = 0x2000, scoped, tag = 'output window, operand 1, single buffered']
    #allocation12 [shape = 's32[1]{0}', space=sflag, size = 0x4, scoped, tag = 'scoped memory for tpu_custom_call.1']
    #allocation13 [shape = 'u8[1024]{0}', space=vmem, size = 0x400, scoped, tag = 'output window, operand 2, single buffered']
    %12 = vsyncpa [#allocation3], 0
    %13 = vsyncpa [#allocation6], 0
    %14 = vsyncpa [#allocation9], 0
    %15 = vsyncpa [#allocation4], 0
    %16 = vsyncpa [#allocation12], 0
    // Predicated region
    $region2: #{tpu_custom_call.1} parent=1 // pred_check
      _
    $region3: #{tpu_custom_call.1} parent=1 // pred_check_branch
      %18 = sbr.rel (0) target = $region5
    $region4: #{tpu_custom_call.1} parent=1 // pred_region
      %s20 = ssub.s32 128, 128
      %21 = vsyncadd [#allocation3], %s20
      %s22 = sshll.u32 [#allocation2], 4
      %s23 = int_to_ptr.vmem [resolvable:$true] %s22
      %28 = dma.hbm_to_vmem [thread:$0]  %s0, 128, %s23, [#allocation3], 64, 64, 4
    $region5: #{tpu_custom_call.1} parent=1 // pred_fallthru
      _
    // Predicated region
    $region6: #{tpu_custom_call.1} parent=1 // pred_check
      _
    $region7: #{tpu_custom_call.1} parent=1 // pred_check_branch
      %30 = sbr.rel (0) target = $region9
    $region8: #{tpu_custom_call.1} parent=1 // pred_region
      %s32 = ssub.s32 256, 256
      %33 = vsyncadd [#allocation6], %s32
      %s34 = sshll.u32 [#allocation5], 4
      %s35 = int_to_ptr.vmem [resolvable:$true] %s34
      %40 = dma.hbm_to_vmem [thread:$0]  %s1, 256, %s35, [#allocation6], 64, 64, 4
    $region9: #{tpu_custom_call.1} parent=1 // pred_fallthru
      _
    // Predicated region
    $region10: #{tpu_custom_call.1} parent=1 // pred_check
      _
    $region11: #{tpu_custom_call.1} parent=1 // pred_check_branch
      %42 = sbr.rel (0) target = $region13
    $region12: #{tpu_custom_call.1} parent=1 // pred_region
      %s44 = ssub.s32 16, 16
      %45 = vsyncadd [#allocation6], %s44
      %s47 = sshll.u32 [#allocation7], 4
      %s48 = int_to_ptr.vmem [resolvable:$true] %s47
      %50 = dma.hbm_to_vmem [thread:$0]  %s2, 16, %s48, [#allocation6]
    $region13: #{tpu_custom_call.1} parent=1 // pred_fallthru
      _
    // Predicated region
    $region14: #{tpu_custom_call.1} parent=1 // pred_check
      _
    $region15: #{tpu_custom_call.1} parent=1 // pred_check_branch
      %52 = sbr.rel (0) target = $region17
    $region16: #{tpu_custom_call.1} parent=1 // pred_region
      %s54 = ssub.s32 256, 256
      %55 = vsyncadd [#allocation9], %s54
      %s56 = sshll.u32 [#allocation8], 4
      %s57 = int_to_ptr.vmem [resolvable:$true] %s56
      %62 = dma.hbm_to_vmem [thread:$0]  %s3, 256, %s57, [#allocation9], 128, 128, 8
    $region17: #{tpu_custom_call.1} parent=1 // pred_fallthru
      _
    // Predicated region
    $region18: #{tpu_custom_call.1} parent=1 // pred_check
      _
    $region19: #{tpu_custom_call.1} parent=1 // pred_check_branch
      %64 = sbr.rel (0) target = $region21
    $region20: #{tpu_custom_call.1} parent=1 // pred_region
      %65 = dma.done [#allocation3], 128
    $region21: #{tpu_custom_call.1} parent=1 // pred_fallthru
      _
    // Predicated region
    $region22: #{tpu_custom_call.1} parent=1 // pred_check
      _
    $region23: #{tpu_custom_call.1} parent=1 // pred_check_branch
      %67 = sbr.rel (0) target = $region25
    $region24: #{tpu_custom_call.1} parent=1 // pred_region
      %68 = dma.done [#allocation6], 256
    $region25: #{tpu_custom_call.1} parent=1 // pred_fallthru
      _
    // Predicated region
    $region26: #{tpu_custom_call.1} parent=1 // pred_check
      _
    $region27: #{tpu_custom_call.1} parent=1 // pred_check_branch
      %70 = sbr.rel (0) target = $region29
    $region28: #{tpu_custom_call.1} parent=1 // pred_region
      %71 = dma.done [#allocation6], 16
    $region29: #{tpu_custom_call.1} parent=1 // pred_fallthru
      _
    // Predicated region
    $region30: #{tpu_custom_call.1} parent=1 // pred_check
      _
    $region31: #{tpu_custom_call.1} parent=1 // pred_check_branch
      %73 = sbr.rel (0) target = $region33
    $region32: #{tpu_custom_call.1} parent=1 // pred_region
      %74 = dma.done [#allocation9], 256
    $region33: #{tpu_custom_call.1} parent=1 // pred_fallthru
      _
    %v76 = vld [vmem:[#allocation2] sm:$0xf]
    %v77 = vld [vmem:[#allocation2 + $0x4] sm:$0xf]
    %v78 = vld [vmem:[#allocation5] sm:$0xf]
    %v79 = vld [vmem:[#allocation5 + $0x4] sm:$0xf]
    %v80 = vld [vmem:[#allocation5 + $0x8] sm:$0xf]
    %v81 = vld [vmem:[#allocation5 + $0xc] sm:$0xf]
    %v82 = vld [vmem:[#allocation7] sm:$0x1]
    %v84 = vlaneseq
    %v85 = vshrl.u32 %v84, 7
    %v86 = vsub.s32 0, %v85
    %v87 = vrot.slane %v82, %v86
    %v91 = vunpack.c.l.b16 %v76
    %v92 = vunpack.c.l.b16 %v77
    %v93 = vpack.c.b16 %v92, %v91
    %v98 = vunpack.c.l.b16 %v78
    %v99 = vunpack.c.l.b16 %v79
    %v100 = vunpack.c.l.b16 %v80
    %v101 = vunpack.c.l.b16 %v81
    %v102 = vpack.c.b16 %v99, %v98
    %v103 = vpack.c.b16 %v101, %v100
    %vm106 = vcmask 261120
    %v108 = vsel %vm106, %v93, 0
    %110 = vmatprep.subr.bf16.mxu0 0
    %111 = vmatpush1.bf16.msra.mxu0 %v102
    %112 = vmatprep.subr.bf16.mxu0 0
    %113 = vmatpush1.bf16.msra.mxu0 %v103
    %114 = vmatprep.subr.bf16.mxu0 0
    %115 = vmatpush1.bf16.msra.mxu0 0
    %116 = vmatprep.subr.bf16.mxu0 0
    %117 = vmatpush1.bf16.msra.mxu0 0
    %118 = vmatprep.subr.bf16.mxu0 0
    %119 = vmatpush1.bf16.msra.mxu0 0
    %120 = vmatprep.subr.bf16.mxu0 0
    %121 = vmatpush1.bf16.msra.mxu0 0
    %122 = vmatprep.subr.bf16.mxu0 0
    %123 = vmatpush1.bf16.msra.mxu0 0
    %124 = vmatprep.subr.bf16.mxu0 0
    %125 = vmatpush1.bf16.msra.mxu0 0
    %126 = vmatprep.subr.bf16.mxu0 0
    %127 = vmatpush1.bf16.msra.mxu0 0
    %128 = vmatprep.subr.bf16.mxu0 0
    %129 = vmatpush1.bf16.msra.mxu0 0
    %130 = vmatprep.subr.bf16.mxu0 0
    %131 = vmatpush1.bf16.msra.mxu0 0
    %132 = vmatprep.subr.bf16.mxu0 0
    %133 = vmatpush1.bf16.msra.mxu0 0
    %134 = vmatprep.subr.bf16.mxu0 0
    %135 = vmatpush1.bf16.msra.mxu0 0
    %136 = vmatprep.subr.bf16.mxu0 0
    %137 = vmatpush1.bf16.msra.mxu0 0
    %138 = vmatprep.subr.bf16.mxu0 0
    %139 = vmatpush1.bf16.msra.mxu0 0
    %140 = vmatprep.subr.bf16.mxu0 0
    %141 = vmatpush1.bf16.msra.mxu0 0
    %142 = vmatprep.mubr.bf16.mxu0 0
    %143 = vmatmul.mubr.bf16.gmra.mrb[0].mxu0 %v108
    %v144 = vpop.f32.mrb[0].mxu0
    %v145 = vadd.f32 %v87, %v144
    %v146 = vpop.f32.mrb[0].mxu0
    %v147 = vpop.f32.mrb[0].mxu0
    %v148 = vadd.f32 %v87, %v147
    %v149 = vpop.f32.mrb[0].mxu0
    %150 = vdwg.mxu0
    %vm151 = vcmask 162816
    %152 = vst.msk [vmem:[#allocation10] sm:$0xff] %vm151, %v145
    %153 = vst.msk [vmem:[#allocation10 + $0x8] sm:$0xff] %vm151, %v148
    %v154 = vld [vmem:[#allocation8] sm:$0xff]
    %v155 = vld [vmem:[#allocation8 + $0x8] sm:$0xff]
    %v156 = vcvt.f32.s32.to.zero.pseudo %v154
    %v157 = vcvt.f32.s32.to.zero.pseudo %v155
    %v158 = vlaneseq
    %v159 = vand.u32 %v158, 127
    %vm160 = vcmp.ne.s32.totalorder %v156, 15
    %vm161 = vcmp.ne.s32.totalorder %v157, 15
    %v162 = vsel %vm160, 1, 0
    %v163 = vsel %vm161, 1, 0
    %v164 = vcvt.s32.f32 %v162
    %v165 = vcvt.s32.f32 %v163
    %vm166 = vcmp.ne.s32.totalorder %v156, 3
    %vm167 = vcmp.ne.s32.totalorder %v157, 3
    %v168 = vsel %vm166, 1, 0
    %v169 = vsel %vm167, 1, 0
    %v170 = vcvt.s32.f32 %v168
    %v171 = vcvt.s32.f32 %v169
    %vm172 = vcmask 130048
    %v173 = vsel %vm172, %v145, -inf
    %174 = vmax.xlane.f32.xlu0 %v173
    %v175 = vpop.xlane.xlu0 %174
    %v176 = vsel %vm172, %v148, -inf
    %177 = vmax.xlane.f32.xlu0 %v176
    %v178 = vpop.xlane.xlu0 %177
    %v179 = vsub.f32 %v145, %v175
    %v180 = vsub.f32 %v148, %v178
    %v181 = vmul.f32 %v179, 1.442695
    %v182 = vpow.pop %v181
    %v183 = vmul.f32 %v180, 1.442695
    %v184 = vpow.pop %v183
    %v185 = vsel %vm172, %v182, 0.0
    %186 = vadd.xlane.f32.xlu0 %v185
    %v187 = vpop.xlane.xlu0 %186
    %v188 = vsel %vm172, %v184, 0.0
    %189 = vadd.xlane.f32.xlu0 %v188
    %v190 = vpop.xlane.xlu0 %189
    %v191 = vrcp.pop %v187
    %v192 = vrcp.pop %v190
    %v193 = vmul.f32 %v182, %v191
    %v194 = vmul.f32 %v184, %v192
    %195 = vset.pattern.permute.xlu0 1
    %196 = vperm.xlu0 %195, %v156
    %v197 = vpop.permute.xlu0 %196
    %198 = vset.pattern.permute.xlu0 1
    %199 = vperm.xlu0 %198, %v157
    %v200 = vpop.permute.xlu0 %199
    %vm201 = vcmp.eq.s32.totalorder %v159, %v197
    %vm202 = vcmp.eq.s32.totalorder %v159, %v200
    %v203 = vsel %vm201, 1, 0
    %v204 = vsel %vm202, 1, 0
    %v205 = vcvt.s32.f32 %v203
    %v206 = vcvt.s32.f32 %v204
    %v207 = vlog2.pop %v187
    %v208 = vmul.f32 %v207, 0.6931472
    %v209 = vlog2.pop %v190
    %v210 = vmul.f32 %v209, 0.6931472
    %v211 = vmul.f32 %v179, %v205
    %v212 = vmul.f32 %v180, %v206
    %v213 = vsel %vm172, %v211, 0.0
    %214 = vadd.xlane.f32.xlu0 %v213
    %v215 = vpop.xlane.xlu0 %214
    %v216 = vsel %vm172, %v212, 0.0
    %217 = vadd.xlane.f32.xlu0 %v216
    %v218 = vpop.xlane.xlu0 %217
    %v219 = vsub.f32 %v208, %v215
    %v220 = vsub.f32 %v210, %v218
    %v221 = vmul.f32 %v219, %v164
    %v222 = vmul.f32 %v220, %v165
    %vm223 = vcmask 15368
    %v224 = vsel %vm223, %v221, 0.0
    %v225 = vrot.slane %v224, 4
    %v226 = vadd.f32 %v224, %v225
    %v227 = vrot.slane %v226, 2
    %v228 = vadd.f32 %v226, %v227
    %v229 = vrot.slane %v228, 1
    %v230 = vadd.f32 %v228, %v229
    %v231 = vsel %vm223, %v222, 0.0
    %v232 = vrot.slane %v231, 4
    %v233 = vadd.f32 %v231, %v232
    %v234 = vrot.slane %v233, 2
    %v235 = vadd.f32 %v233, %v234
    %v236 = vrot.slane %v235, 1
    %v237 = vadd.f32 %v235, %v236
    %v238 = vsel %vm223, %v164, 0.0
    %v239 = vrot.slane %v238, 4
    %v240 = vadd.f32 %v238, %v239
    %v241 = vrot.slane %v240, 2
    %v242 = vadd.f32 %v240, %v241
    %v243 = vrot.slane %v242, 1
    %v244 = vadd.f32 %v242, %v243
    %v245 = vsel %vm223, %v165, 0.0
    %v246 = vrot.slane %v245, 4
    %v247 = vadd.f32 %v245, %v246
    %v248 = vrot.slane %v247, 2
    %v249 = vadd.f32 %v247, %v248
    %v250 = vrot.slane %v249, 1
    %v251 = vadd.f32 %v249, %v250
    %v252 = vadd.s32 %v156, 16
    %v253 = vadd.s32 %v157, 16
    %vm254 = vcmask 162944
    %v255 = vsel %vm254, %v145, -inf
    %256 = vmax.xlane.f32.xlu0 %v255
    %v257 = vpop.xlane.xlu0 %256
    %v258 = vsel %vm254, %v148, -inf
    %259 = vmax.xlane.f32.xlu0 %v258
    %v260 = vpop.xlane.xlu0 %259
    %v261 = vsub.f32 %v145, %v257
    %v262 = vsub.f32 %v148, %v260
    %v263 = vmul.f32 %v261, 1.442695
    %v264 = vpow.pop %v263
    %v265 = vmul.f32 %v262, 1.442695
    %v266 = vpow.pop %v265
    %269 = vrot.lane.b32.xlu0 %v264, 112
    %v270 = vpop.permute.xlu0 %269
    %271 = vrot.lane.b32.xlu0 %v266, 112
    %v272 = vpop.permute.xlu0 %271
    %vm275 = vcmask 31744
    %v276 = vsel %vm275, %v270, 0.0
    %277 = vadd.xlane.f32.xlu0 %v276
    %v278 = vpop.xlane.xlu0 %277
    %v279 = vsel %vm275, %v272, 0.0
    %280 = vadd.xlane.f32.xlu0 %v279
    %v281 = vpop.xlane.xlu0 %280
    %v282 = vrcp.pop %v278
    %v283 = vrcp.pop %v281
    %v284 = vmul.f32 %v264, %v282
    %v285 = vmul.f32 %v266, %v283
    %286 = vset.pattern.permute.xlu0 2
    %287 = vperm.xlu0 %286, %v252
    %v288 = vpop.permute.xlu0 %287
    %289 = vset.pattern.permute.xlu0 2
    %290 = vperm.xlu0 %289, %v253
    %v291 = vpop.permute.xlu0 %290
    %vm292 = vcmp.eq.s32.totalorder %v159, %v288
    %vm293 = vcmp.eq.s32.totalorder %v159, %v291
    %v294 = vsel %vm292, 1, 0
    %v295 = vsel %vm293, 1, 0
    %v296 = vcvt.s32.f32 %v294
    %v297 = vcvt.s32.f32 %v295
    %v298 = vlog2.pop %v278
    %v299 = vmul.f32 %v298, 0.6931472
    %v300 = vlog2.pop %v281
    %v301 = vmul.f32 %v300, 0.6931472
    %v302 = vmul.f32 %v261, %v296
    %v303 = vmul.f32 %v262, %v297
    %306 = vrot.lane.b32.xlu0 %v302, 112
    %v307 = vpop.permute.xlu0 %306
    %308 = vrot.lane.b32.xlu0 %v303, 112
    %v309 = vpop.permute.xlu0 %308
    %v312 = vsel %vm275, %v307, 0.0
    %313 = vadd.xlane.f32.xlu0 %v312
    %v314 = vpop.xlane.xlu0 %313
    %v315 = vsel %vm275, %v309, 0.0
    %316 = vadd.xlane.f32.xlu0 %v315
    %v317 = vpop.xlane.xlu0 %316
    %v318 = vsub.f32 %v299, %v314
    %v319 = vsub.f32 %v301, %v317
    %v320 = vmul.f32 %v318, %v170
    %v321 = vmul.f32 %v319, %v171
    %vm322 = vcmask 23568
    %v323 = vsel %vm322, %v320, 0.0
    %v324 = vrot.slane %v323, 4
    %v325 = vadd.f32 %v323, %v324
    %v326 = vrot.slane %v325, 2
    %v327 = vadd.f32 %v325, %v326
    %v328 = vrot.slane %v327, 1
    %v329 = vadd.f32 %v327, %v328
    %v330 = vsel %vm322, %v321, 0.0
    %v331 = vrot.slane %v330, 4
    %v332 = vadd.f32 %v330, %v331
    %v333 = vrot.slane %v332, 2
    %v334 = vadd.f32 %v332, %v333
    %v335 = vrot.slane %v334, 1
    %v336 = vadd.f32 %v334, %v335
    %v337 = vsel %vm322, %v170, 0.0
    %v338 = vrot.slane %v337, 4
    %v339 = vadd.f32 %v337, %v338
    %v340 = vrot.slane %v339, 2
    %v341 = vadd.f32 %v339, %v340
    %v342 = vrot.slane %v341, 1
    %v343 = vadd.f32 %v341, %v342
    %v344 = vsel %vm322, %v171, 0.0
    %v345 = vrot.slane %v344, 4
    %v346 = vadd.f32 %v344, %v345
    %v347 = vrot.slane %v346, 2
    %v348 = vadd.f32 %v346, %v347
    %v349 = vrot.slane %v348, 1
    %v350 = vadd.f32 %v348, %v349
    %353 = vrot.lane.b32.xlu0 %v154, 17
    %v354 = vpop.permute.xlu0 %353
    %355 = vrot.lane.b32.xlu0 %v155, 17
    %v356 = vpop.permute.xlu0 %355
    %v359 = vmul.f32 %v284, %v354
    %v360 = vmul.f32 %v285, %v356
    %vm361 = vcmask 146568
    %v362 = vsel %vm361, %v359, -inf
    %v363 = vrot.slane %v362, 4
    %v364 = vmax.f32 %v362, %v363
    %v365 = vrot.slane %v364, 2
    %v366 = vmax.f32 %v364, %v365
    %v367 = vrot.slane %v366, 1
    %v368 = vmax.f32 %v366, %v367
    %v369 = vsel %vm361, %v360, -inf
    %v370 = vrot.slane %v369, 4
    %v371 = vmax.f32 %v369, %v370
    %v372 = vrot.slane %v371, 2
    %v373 = vmax.f32 %v371, %v372
    %v374 = vrot.slane %v373, 1
    %v375 = vmax.f32 %v373, %v374
    %vm376 = vcmp.eq.s32.totalorder %v159, 0
    %v377 = vsel %vm376, 0.2, 0.0
    %v378 = vadd.f32 %v193, %v377
    %v379 = vadd.f32 %v194, %v377
    %380 = vst.msk [vmem:[#allocation11] sm:$0xff] %vm172, %v378
    %381 = vst.msk [vmem:[#allocation11 + $0x8] sm:$0xff] %vm172, %v379
    %382 = vst.msk [vmem:[#allocation11] sm:$0xff] %vm254, %v284
    %383 = vst.msk [vmem:[#allocation11 + $0x8] sm:$0xff] %vm254, %v285
    %385 = vset.pattern.permute.xlu0 17
    %386 = vperm.xlu0 %385, %v368
    %v387 = vpop.permute.xlu0 %386
    %390 = vset.pattern.permute.xlu0 17
    %391 = vperm.xlu0 %390, %v375
    %v392 = vpop.permute.xlu0 %391
    %v394 = vsel %vm376, %v387, 0.0
    %v395 = vsel %vm376, %v392, 0.0
    %vm396 = vcmp.eq.s32.totalorder %v159, 1
    %398 = vset.pattern.permute.xlu0 1
    %399 = vperm.xlu0 %398, %v230
    %v400 = vpop.permute.xlu0 %399
    %403 = vset.pattern.permute.xlu0 1
    %404 = vperm.xlu0 %403, %v237
    %v405 = vpop.permute.xlu0 %404
    %v407 = vsel %vm396, %v400, 0.0
    %v408 = vsel %vm396, %v405, 0.0
    %v409 = vadd.f32 %v394, %v407
    %v410 = vadd.f32 %v395, %v408
    %vm411 = vcmp.eq.s32.totalorder %v159, 2
    %413 = vset.pattern.permute.xlu0 1
    %414 = vperm.xlu0 %413, %v244
    %v415 = vpop.permute.xlu0 %414
    %418 = vset.pattern.permute.xlu0 1
    %419 = vperm.xlu0 %418, %v251
    %v420 = vpop.permute.xlu0 %419
    %v422 = vsel %vm411, %v415, 0.0
    %v423 = vsel %vm411, %v420, 0.0
    %v424 = vadd.f32 %v409, %v422
    %v425 = vadd.f32 %v410, %v423
    %vm426 = vcmp.eq.s32.totalorder %v159, 3
    %428 = vset.pattern.permute.xlu0 2
    %429 = vperm.xlu0 %428, %v329
    %v430 = vpop.permute.xlu0 %429
    %433 = vset.pattern.permute.xlu0 2
    %434 = vperm.xlu0 %433, %v336
    %v435 = vpop.permute.xlu0 %434
    %v437 = vsel %vm426, %v430, 0.0
    %v438 = vsel %vm426, %v435, 0.0
    %v439 = vadd.f32 %v424, %v437
    %v440 = vadd.f32 %v425, %v438
    %vm441 = vcmp.eq.s32.totalorder %v159, 4
    %443 = vset.pattern.permute.xlu0 2
    %444 = vperm.xlu0 %443, %v343
    %v445 = vpop.permute.xlu0 %444
    %448 = vset.pattern.permute.xlu0 2
    %449 = vperm.xlu0 %448, %v350
    %v450 = vpop.permute.xlu0 %449
    %v452 = vsel %vm441, %v445, 0.0
    %v453 = vsel %vm441, %v450, 0.0
    %v454 = vadd.f32 %v439, %v452
    %v455 = vadd.f32 %v440, %v453
    %vm456 = vcmask 57344
    %457 = vst.msk [vmem:[#allocation13] sm:$0x1] %vm456, %v454
    %458 = vst.msk [vmem:[#allocation13 + $0x1] sm:$0x1] %vm456, %v455
    // Predicated region
    $region34: #{tpu_custom_call.1} parent=1 // pred_check
      _
    $region35: #{tpu_custom_call.1} parent=1 // pred_check_branch
      %460 = sbr.rel (0) target = $region37
    $region36: #{tpu_custom_call.1} parent=1 // pred_region
      %s462 = ssub.s32 256, 256
      %463 = vsyncadd [#allocation4], %s462
      %s464 = sshll.u32 [#allocation10], 4
      %s465 = int_to_ptr.vmem [resolvable:$true] %s464
      %470 = dma.vmem_to_hbm [thread:$0]  %s465, 256, %s4, [#allocation4], 128, 128, 8
    $region37: #{tpu_custom_call.1} parent=1 // pred_fallthru
      _
    // Predicated region
    $region38: #{tpu_custom_call.1} parent=1 // pred_check
      _
    $region39: #{tpu_custom_call.1} parent=1 // pred_check_branch
      %472 = sbr.rel (0) target = $region41
    $region40: #{tpu_custom_call.1} parent=1 // pred_region
      %s474 = ssub.s32 256, 256
      %475 = vsyncadd [#allocation12], %s474
      %s476 = sshll.u32 [#allocation11], 4
      %s477 = int_to_ptr.vmem [resolvable:$true] %s476
      %482 = dma.vmem_to_hbm [thread:$0]  %s477, 256, %s5, [#allocation12], 128, 128, 8
    $region41: #{tpu_custom_call.1} parent=1 // pred_fallthru
      _
    // Predicated region
    $region42: #{tpu_custom_call.1} parent=1 // pred_check
      _
    $region43: #{tpu_custom_call.1} parent=1 // pred_check_branch
      %484 = sbr.rel (0) target = $region45
    $region44: #{tpu_custom_call.1} parent=1 // pred_region
      %s486 = ssub.s32 32, 32
      %487 = vsyncadd [#allocation12], %s486
      %s488 = sshll.u32 [#allocation13], 4
      %s489 = int_to_ptr.vmem [resolvable:$true] %s488
      %494 = dma.vmem_to_hbm [thread:$0]  %s489, 32, %s6, [#allocation12], 16, 16, 1
    $region45: #{tpu_custom_call.1} parent=1 // pred_fallthru
      _
    // Predicated region
    $region46: #{tpu_custom_call.1} parent=1 // pred_check
      _
    $region47: #{tpu_custom_call.1} parent=1 // pred_check_branch
      %496 = sbr.rel (0) target = $region49
    $region48: #{tpu_custom_call.1} parent=1 // pred_region
      %497 = dma.done [#allocation4], 256
    $region49: #{tpu_custom_call.1} parent=1 // pred_fallthru
      _
    // Predicated region
    $region50: #{tpu_custom_call.1} parent=1 // pred_check
      _
    $region51: #{tpu_custom_call.1} parent=1 // pred_check_branch
      %499 = sbr.rel (0) target = $region53
    $region52: #{tpu_custom_call.1} parent=1 // pred_region
      %500 = dma.done [#allocation12], 256
    $region53: #{tpu_custom_call.1} parent=1 // pred_fallthru
      _
    // Predicated region
    $region54: #{tpu_custom_call.1} parent=1 // pred_check
      _
    $region55: #{tpu_custom_call.1} parent=1 // pred_check_branch
      %502 = sbr.rel (0) target = $region57
    $region56: #{tpu_custom_call.1} parent=1 // pred_region
      %503 = dma.done [#allocation12], 32
    $region57: #{tpu_custom_call.1} parent=1 // pred_fallthru
      _
    %504 = vsyncpa [#allocation3], 1
    %505 = vsyncpa [#allocation6], 1
    %506 = vsyncpa [#allocation9], 1
    %507 = vsyncpa [#allocation4], 1
    %508 = vsyncpa [#allocation12], 1

</llo_original>
